<compile_context>
chip_gen: v5e
topology: v5e:2x2
jax: 0.10.0
libtpu: 0.0.40
codegen_flags: <defaults>
</compile_context>

<pallas_src>
import functools

import jax
import jax.numpy as jnp
from jax.experimental import pallas as pl
from jax.experimental.pallas import tpu as pltpu


def _round_up(x, m):
    return (x + m - 1) // m * m


def _gaussian_kernel(x_ref, ht_ref, z_ref, y_ref, acc_ref, *, sigma):
    """Tiled y = x @ H^T + sigma * z with an f32 accumulator over the K grid axis."""
    k = pl.program_id(2)

    @pl.when(k == 0)
    def _():
        acc_ref[...] = jnp.zeros_like(acc_ref)

    acc_ref[...] += jnp.dot(
        x_ref[...], ht_ref[...], preferred_element_type=jnp.float32
    )

    @pl.when(k == pl.num_programs(2) - 1)
    def _():
        y_ref[...] = (acc_ref[...] + sigma * z_ref[...]).astype(y_ref.dtype)


def gaussian_forward(x, ht, sigma, key, *, tb=256, tm=512, tk=1024,
                     mxu_dtype=jnp.float32):
    """y ~ N(Hx, sigma^2).

    x:  (B, h, w) or (B, N) float32
    ht: (N, M) float32 — H transposed once at setup time
    key: jax PRNG key for the additive noise
    mxu_dtype: set to jnp.bfloat16 on v6e/v7x to halve the dominant H^T HBM stream
               (f32 accumulation is kept either way).
    """
    B = x.shape[0]
    N, M = ht.shape
    x_flat = x.reshape(B, -1).astype(jnp.float32)
    assert x_flat.shape[1] == N, (x_flat.shape, ht.shape)

    # torch.randn equivalent — generated outside the kernel, tiny (B*M) stream.
    z = jax.random.normal(key, (B, M), dtype=jnp.float32)

    # Tile sizes: respect (8, 128) layout, cap so double-buffered blocks fit the
    # default scoped VMEM limit on all of v5e/v6e/v7x.
    tb = min(tb, _round_up(B, 8))
    tm = min(tm, _round_up(M, 128))
    tk = min(tk, _round_up(N, 128))
    Bp, Mp, Np = _round_up(B, tb), _round_up(M, tm), _round_up(N, tk)

    xp = jnp.pad(x_flat, ((0, Bp - B), (0, Np - N))).astype(mxu_dtype)
    htp = jnp.pad(ht, ((0, Np - N), (0, Mp - M))).astype(mxu_dtype)
    zp = jnp.pad(z, ((0, Bp - B), (0, Mp - M)))

    grid = (Bp // tb, Mp // tm, Np // tk)

    kernel = functools.partial(_gaussian_kernel, sigma=float(sigma))

    cost = pl.CostEstimate(
        flops=2 * Bp * Mp * Np,
        transcendentals=0,
        bytes_accessed=4 * (Bp * Np + Np * Mp + 2 * Bp * Mp),
    )

    yp = pl.pallas_call(
        kernel,
        out_shape=jax.ShapeDtypeStruct((Bp, Mp), jnp.float32),
        grid_spec=pltpu.PrefetchScalarGridSpec(
            num_scalar_prefetch=0,
            grid=grid,
            in_specs=[
                pl.BlockSpec((tb, tk), lambda b, m, k: (b, k)),   # x tile
                pl.BlockSpec((tk, tm), lambda b, m, k: (k, m)),   # H^T tile
                pl.BlockSpec((tb, tm), lambda b, m, k: (b, m)),   # noise tile
            ],
            out_specs=pl.BlockSpec((tb, tm), lambda b, m, k: (b, m)),
            scratch_shapes=[pltpu.VMEM((tb, tm), jnp.float32)],
        ),
        compiler_params=pltpu.CompilerParams(
            dimension_semantics=("parallel", "parallel", "arbitrary"),
        ),
        cost_estimate=cost,
    )(xp, htp, zp)

    return yp[:B, :M]


def make_gaussian(H, sigma, *, mxu_dtype=jnp.float32, tb=256, tm=512, tk=1024):
    """Build a Gaussian(meas_op=Linear(H), sigma) forward: (x, key) -> y.

    H is transposed exactly once here (fixed measurement operator), so the
    per-call wrapper never rewrites M*N*4 bytes of HBM.
    """
    ht = jnp.transpose(jnp.asarray(H, jnp.float32))  # (N, M), computed once

    @jax.jit
    def forward(x, key):
        return gaussian_forward(
            x, ht, sigma, key, tb=tb, tm=tm, tk=tk, mxu_dtype=mxu_dtype
        )

    return forward


if __name__ == "__main__":
    key = jax.random.PRNGKey(0)
    kx, kh, kz = jax.random.split(key, 3)

    # Small shapes consistent with the module: batch of (h, w) images, M measurements.
    B, h, w = 10, 16, 16
    N = h * w                      # 256 flattened pixels
    M = 400                        # number of measurements (exercises M padding)
    sigma = 10.0

    x = jax.random.uniform(kx, (B, h, w), jnp.float32, minval=-1.0, maxval=1.0)
    H = jax.random.uniform(kh, (M, N), jnp.float32)

    gaussian = make_gaussian(H, sigma)
    y = jax.block_until_ready(gaussian(x, kz))

    assert y.shape == (B, M), y.shape
    assert y.dtype == jnp.float32

    # Deterministic reference: same noise key -> exact expected output.
    z = jax.random.normal(kz, (B, M), dtype=jnp.float32)
    y_ref = x.reshape(B, N) @ H.T + sigma * z
    max_err = float(jnp.max(jnp.abs(y - y_ref)))
    assert max_err < 5e-2, max_err

    print("KERNEL_OK")
</pallas_src>

<mosaic_0001>
module attributes {stable_mosaic.version = 11 : i64} {
  func.func @_gaussian_kernel(%arg0: i32, %arg1: i32, %arg2: i32, %arg3: memref<16x256xf32, #tpu.memory_space<vmem>>, %arg4: memref<256x512xf32, #tpu.memory_space<vmem>>, %arg5: memref<16x512xf32, #tpu.memory_space<vmem>>, %arg6: memref<16x512xf32, #tpu.memory_space<vmem>>, %arg7: memref<16x512xf32, #tpu.memory_space<vmem>>) attributes {dimension_semantics = [#tpu.dimension_semantics<parallel>, #tpu.dimension_semantics<parallel>, #tpu.dimension_semantics<arbitrary>], iteration_bounds = array<i64: 1, 1, 1>, scalar_prefetch = 0 : i64, scratch_operands = 1 : i64, tpu.core_type = #tpu.core_type<tc>, window_params = [{transform_indices = @transform_0, window_bounds = array<i64: 16, 256>}, {transform_indices = @transform_1, window_bounds = array<i64: 256, 512>}, {transform_indices = @transform_2, window_bounds = array<i64: 16, 512>}, {transform_indices = @transform_3, window_bounds = array<i64: 16, 512>}]} {
    %c0_i32 = arith.constant 0 : i32
    %0 = arith.cmpi eq, %arg2, %c0_i32 : i32
    %1 = arith.extui %0 : i1 to i32
    %c0_i32_0 = arith.constant 0 : i32
    %2 = arith.cmpi ne, %1, %c0_i32_0 : i32
    scf.if %2 {
      %cst_10 = arith.constant 0.000000e+00 : f32
      %12 = vector.broadcast %cst_10 : f32 to vector<16x512xf32>
      %c0_11 = arith.constant 0 : index
      %c0_12 = arith.constant 0 : index
      %13 = vector.load %arg7[%c0_11, %c0_12] : memref<16x512xf32, #tpu.memory_space<vmem>>, vector<16x512xf32>
      tpu.vector_store %arg7[%c0_11, %c0_12], %12 {strides = array<i32>} : memref<16x512xf32, #tpu.memory_space<vmem>>, vector<16x512xf32>,
    } else {
    }
    %c0 = arith.constant 0 : index
    %c0_1 = arith.constant 0 : index
    %3 = vector.load %arg7[%c0, %c0_1] : memref<16x512xf32, #tpu.memory_space<vmem>>, vector<16x512xf32>
    %c0_2 = arith.constant 0 : index
    %c0_3 = arith.constant 0 : index
    %4 = vector.load %arg3[%c0_2, %c0_3] : memref<16x256xf32, #tpu.memory_space<vmem>>, vector<16x256xf32>
    %c0_4 = arith.constant 0 : index
    %c0_5 = arith.constant 0 : index
    %5 = vector.load %arg4[%c0_4, %c0_5] : memref<256x512xf32, #tpu.memory_space<vmem>>, vector<256x512xf32>
    %cst = arith.constant dense<0.000000e+00> : vector<16x512xf32>
    %6 = tpu.matmul %4, %5, %cst {dimension_numbers = #tpu.dot_dimension_numbers<[1], [0], [0], [1], [0, 0, 1, 1], [], []>} : vector<16x256xf32>, vector<256x512xf32>, vector<16x512xf32> -> vector<16x512xf32>
    %7 = arith.addf %3, %6 : vector<16x512xf32>
    %c0_6 = arith.constant 0 : index
    %c0_7 = arith.constant 0 : index
    %8 = vector.load %arg7[%c0_6, %c0_7] : memref<16x512xf32, #tpu.memory_space<vmem>>, vector<16x512xf32>
    tpu.vector_store %arg7[%c0_6, %c0_7], %7 {strides = array<i32>} : memref<16x512xf32, #tpu.memory_space<vmem>>, vector<16x512xf32>,
    %c0_i32_8 = arith.constant 0 : i32
    %9 = arith.cmpi eq, %arg2, %c0_i32_8 : i32
    %10 = arith.extui %9 : i1 to i32
    %c0_i32_9 = arith.constant 0 : i32
    %11 = arith.cmpi ne, %10, %c0_i32_9 : i32
    scf.if %11 {
      %c0_10 = arith.constant 0 : index
      %c0_11 = arith.constant 0 : index
      %12 = vector.load %arg7[%c0_10, %c0_11] : memref<16x512xf32, #tpu.memory_space<vmem>>, vector<16x512xf32>
      %c0_12 = arith.constant 0 : index
      %c0_13 = arith.constant 0 : index
      %13 = vector.load %arg5[%c0_12, %c0_13] : memref<16x512xf32, #tpu.memory_space<vmem>>, vector<16x512xf32>
      %cst_14 = arith.constant 1.000000e+01 : f32
      %14 = vector.broadcast %cst_14 : f32 to vector<16x512xf32>
      %15 = arith.mulf %14, %13 : vector<16x512xf32>
      %16 = arith.addf %12, %15 : vector<16x512xf32>
      %c0_15 = arith.constant 0 : index
      %c0_16 = arith.constant 0 : index
      %17 = vector.load %arg6[%c0_15, %c0_16] : memref<16x512xf32, #tpu.memory_space<vmem>>, vector<16x512xf32>
      tpu.vector_store %arg6[%c0_15, %c0_16], %16 {strides = array<i32>} : memref<16x512xf32, #tpu.memory_space<vmem>>, vector<16x512xf32>,
    } else {
    }
    return
  }
  func.func @transform_0(%arg0: i32, %arg1: i32, %arg2: i32) -> (i32, i32) {
    %c0_i32 = arith.constant 0 : i32
    return %arg0, %arg2 : i32, i32
  }
  func.func @transform_1(%arg0: i32, %arg1: i32, %arg2: i32) -> (i32, i32) {
    %c0_i32 = arith.constant 0 : i32
    return %arg2, %arg1 : i32, i32
  }
  func.func @transform_2(%arg0: i32, %arg1: i32, %arg2: i32) -> (i32, i32) {
    %c0_i32 = arith.constant 0 : i32
    return %arg0, %arg1 : i32, i32
  }
  func.func @transform_3(%arg0: i32, %arg1: i32, %arg2: i32) -> (i32, i32) {
    %c0_i32 = arith.constant 0 : i32
    return %arg0, %arg1 : i32, i32
  }
}

</mosaic_0001>

<llo_original>
// kernel: forward.1
$region0: #{forward.1}
  #allocation0 [shape = 'u32[]', space=smem, size = 0x4, offset = 0x4, fixed_abs, tag = 'smem constant byte address 0x4 - core index']
  #allocation1 [shape = 'u32[72,128]{1,0:T(1,128)}', space=vmem, size = 0x9000, scoped, tag = 'internal scratch']
  #allocation2 [shape = 'f32[16,512]{1,0:T(8,128)}', space=vmem, size = 0x8000, scoped, tag = 'scratch operand']
  %s0 = inlined_call_operand.vmem [shape: f32[16,256], index: 0, kind: input, shape index: {}]
  %s1 = inlined_call_operand.hbm [shape: f32[256,512], index: 1, kind: input, shape index: {}]
  %s2 = inlined_call_operand.vmem [shape: f32[16,512], index: 2, kind: input, shape index: {}]
  %s3 = inlined_call_operand.hbm [shape: f32[16,512], index: 3, kind: output, shape index: {}]
  %s4 = sld [smem:[#allocation0]]
  $region34: #{forward.1} parent=0
    _
  %s6 = ssub.s32 1, %s4
  %s7 = scalar_select 0, %s6, %s4
  $region1: #{forward.1} parent=0
    #allocation3 [shape = 'u8[524288]{0}', space=vmem, size = 0x80000, scoped, tag = 'input window, operand 1, single buffered']
    #allocation4 [shape = 's32[1]{0}', space=sflag, size = 0x4, scoped, tag = 'scoped memory for forward.1']
    #allocation5 [shape = 's32[1]{0}', space=sflag, size = 0x4, scoped, tag = 'scoped memory for forward.1']
    #allocation6 [shape = 'u8[32768]{0}', space=vmem, size = 0x8000, scoped, tag = 'output window, operand 0, single buffered']
    %8 = vsyncpa [#allocation4], 0
    %9 = vsyncpa [#allocation5], 0
    // Predicated region
    $region2: #{forward.1} parent=1 // pred_check
      _
    $region3: #{forward.1} parent=1 // pred_check_branch
      %11 = sbr.rel (0) target = $region5
    $region4: #{forward.1} parent=1 // pred_region
      _
    $region5: #{forward.1} parent=1 // pred_fallthru
      _
    // Predicated region
    $region6: #{forward.1} parent=1 // pred_check
      _
    $region7: #{forward.1} parent=1 // pred_check_branch
      %13 = sbr.rel (0) target = $region9
    $region8: #{forward.1} parent=1 // pred_region
      %15 = vsyncadd [#allocation4], 0
      %s16 = sshll.u32 %s1, 4
      %s17 = int_to_ptr.hbm [resolvable:$true] %s16
      %s18 = sshll.u32 [#allocation3], 4
      %s19 = int_to_ptr.vmem [resolvable:$true] %s18
      %24 = dma.hbm_to_vmem [thread:$0]  %s17, 16384, %s19, [#allocation4], 512, 512, 32
    $region9: #{forward.1} parent=1 // pred_fallthru
      _
    // Predicated region
    $region10: #{forward.1} parent=1 // pred_check
      _
    $region11: #{forward.1} parent=1 // pred_check_branch
      %26 = sbr.rel (0) target = $region13
    $region12: #{forward.1} parent=1 // pred_region
      _
    $region13: #{forward.1} parent=1 // pred_fallthru
      _
    // Predicated region
    $region14: #{forward.1} parent=1 // pred_check
      _
    $region15: #{forward.1} parent=1 // pred_check_branch
      %28 = sbr.rel (0) target = $region17
    $region16: #{forward.1} parent=1 // pred_region
      %30 = dma.done [#allocation4], 16384
    $region17: #{forward.1} parent=1 // pred_fallthru
      _
    %p31 = scmp.eq.s32.totalorder 0, 0
    // Predicated region
    $region18: #{forward.1} parent=1 // pred_check
      %p32 = pneg %p31
    $region19: #{forward.1} parent=1 // pred_check_branch
      %34 = sbr.rel (%p32) target = $region21
    $region20: #{forward.1} parent=1 // pred_region
      %35 = vst [vmem:[#allocation2] sm:$0xff] 0.0
      %36 = vst [vmem:[#allocation2 + $0x8] sm:$0xff] 0.0
      %37 = vst [vmem:[#allocation2 + $0x10] sm:$0xff] 0.0
      %38 = vst [vmem:[#allocation2 + $0x18] sm:$0xff] 0.0
      %39 = vst [vmem:[#allocation2 + $0x20] sm:$0xff] 0.0
      %40 = vst [vmem:[#allocation2 + $0x28] sm:$0xff] 0.0
      %41 = vst [vmem:[#allocation2 + $0x30] sm:$0xff] 0.0
      %42 = vst [vmem:[#allocation2 + $0x38] sm:$0xff] 0.0
    $region21: #{forward.1} parent=1 // pred_fallthru
      _
    %v43 = vld [vmem:[#allocation2] sm:$0xff]
    %v44 = vld [vmem:[#allocation2 + $0x8] sm:$0xff]
    %v45 = vld [vmem:[#allocation2 + $0x10] sm:$0xff]
    %v46 = vld [vmem:[#allocation2 + $0x18] sm:$0xff]
    %v47 = vld [vmem:[#allocation2 + $0x20] sm:$0xff]
    %v48 = vld [vmem:[#allocation2 + $0x28] sm:$0xff]
    %v49 = vld [vmem:[#allocation2 + $0x30] sm:$0xff]
    %v50 = vld [vmem:[#allocation2 + $0x38] sm:$0xff]
    %v51 = vld [vmem:[%s0] sm:$0xff]
    %v52 = vld [vmem:[%s0 + $0x8] sm:$0xff]
    %v53 = vld [vmem:[%s0 + $0x10] sm:$0xff]
    %v54 = vld [vmem:[%s0 + $0x18] sm:$0xff]
    %v55 = vld [vmem:[#allocation3] sm:$0xff]
    %v56 = vld [vmem:[#allocation3 + $0x8] sm:$0xff]
    %v57 = vld [vmem:[#allocation3 + $0x10] sm:$0xff]
    %v58 = vld [vmem:[#allocation3 + $0x18] sm:$0xff]
    %v59 = vld [vmem:[#allocation3 + $0x20] sm:$0xff]
    %v60 = vld [vmem:[#allocation3 + $0x28] sm:$0xff]
    %v61 = vld [vmem:[#allocation3 + $0x30] sm:$0xff]
    %v62 = vld [vmem:[#allocation3 + $0x38] sm:$0xff]
    %v63 = vld [vmem:[#allocation3 + $0x40] sm:$0xff]
    %v64 = vld [vmem:[#allocation3 + $0x48] sm:$0xff]
    %v65 = vld [vmem:[#allocation3 + $0x50] sm:$0xff]
    %v66 = vld [vmem:[#allocation3 + $0x58] sm:$0xff]
    %v67 = vld [vmem:[#allocation3 + $0x60] sm:$0xff]
    %v68 = vld [vmem:[#allocation3 + $0x68] sm:$0xff]
    %v69 = vld [vmem:[#allocation3 + $0x70] sm:$0xff]
    %v70 = vld [vmem:[#allocation3 + $0x78] sm:$0xff]
    %v71 = vld [vmem:[#allocation3 + $0x80] sm:$0xff]
    %v72 = vld [vmem:[#allocation3 + $0x88] sm:$0xff]
    %v73 = vld [vmem:[#allocation3 + $0x90] sm:$0xff]
    %v74 = vld [vmem:[#allocation3 + $0x98] sm:$0xff]
    %v75 = vld [vmem:[#allocation3 + $0xa0] sm:$0xff]
    %v76 = vld [vmem:[#allocation3 + $0xa8] sm:$0xff]
    %v77 = vld [vmem:[#allocation3 + $0xb0] sm:$0xff]
    %v78 = vld [vmem:[#allocation3 + $0xb8] sm:$0xff]
    %v79 = vld [vmem:[#allocation3 + $0xc0] sm:$0xff]
    %v80 = vld [vmem:[#allocation3 + $0xc8] sm:$0xff]
    %v81 = vld [vmem:[#allocation3 + $0xd0] sm:$0xff]
    %v82 = vld [vmem:[#allocation3 + $0xd8] sm:$0xff]
    %v83 = vld [vmem:[#allocation3 + $0xe0] sm:$0xff]
    %v84 = vld [vmem:[#allocation3 + $0xe8] sm:$0xff]
    %v85 = vld [vmem:[#allocation3 + $0xf0] sm:$0xff]
    %v86 = vld [vmem:[#allocation3 + $0xf8] sm:$0xff]
    %v87 = vld [vmem:[#allocation3 + $0x100] sm:$0xff]
    %v88 = vld [vmem:[#allocation3 + $0x108] sm:$0xff]
    %v89 = vld [vmem:[#allocation3 + $0x110] sm:$0xff]
    %v90 = vld [vmem:[#allocation3 + $0x118] sm:$0xff]
    %v91 = vld [vmem:[#allocation3 + $0x120] sm:$0xff]
    %v92 = vld [vmem:[#allocation3 + $0x128] sm:$0xff]
    %v93 = vld [vmem:[#allocation3 + $0x130] sm:$0xff]
    %v94 = vld [vmem:[#allocation3 + $0x138] sm:$0xff]
    %v95 = vld [vmem:[#allocation3 + $0x140] sm:$0xff]
    %v96 = vld [vmem:[#allocation3 + $0x148] sm:$0xff]
    %v97 = vld [vmem:[#allocation3 + $0x150] sm:$0xff]
    %v98 = vld [vmem:[#allocation3 + $0x158] sm:$0xff]
    %v99 = vld [vmem:[#allocation3 + $0x160] sm:$0xff]
    %v100 = vld [vmem:[#allocation3 + $0x168] sm:$0xff]
    %v101 = vld [vmem:[#allocation3 + $0x170] sm:$0xff]
    %v102 = vld [vmem:[#allocation3 + $0x178] sm:$0xff]
    %v103 = vld [vmem:[#allocation3 + $0x180] sm:$0xff]
    %v104 = vld [vmem:[#allocation3 + $0x188] sm:$0xff]
    %v105 = vld [vmem:[#allocation3 + $0x190] sm:$0xff]
    %v106 = vld [vmem:[#allocation3 + $0x198] sm:$0xff]
    %v107 = vld [vmem:[#allocation3 + $0x1a0] sm:$0xff]
    %v108 = vld [vmem:[#allocation3 + $0x1a8] sm:$0xff]
    %v109 = vld [vmem:[#allocation3 + $0x1b0] sm:$0xff]
    %v110 = vld [vmem:[#allocation3 + $0x1b8] sm:$0xff]
    %v111 = vld [vmem:[#allocation3 + $0x1c0] sm:$0xff]
    %v112 = vld [vmem:[#allocation3 + $0x1c8] sm:$0xff]
    %v113 = vld [vmem:[#allocation3 + $0x1d0] sm:$0xff]
    %v114 = vld [vmem:[#allocation3 + $0x1d8] sm:$0xff]
    %v115 = vld [vmem:[#allocation3 + $0x1e0] sm:$0xff]
    %v116 = vld [vmem:[#allocation3 + $0x1e8] sm:$0xff]
    %v117 = vld [vmem:[#allocation3 + $0x1f0] sm:$0xff]
    %v118 = vld [vmem:[#allocation3 + $0x1f8] sm:$0xff]
    %v119 = vld [vmem:[#allocation3 + $0x200] sm:$0xff]
    %v120 = vld [vmem:[#allocation3 + $0x208] sm:$0xff]
    %v121 = vld [vmem:[#allocation3 + $0x210] sm:$0xff]
    %v122 = vld [vmem:[#allocation3 + $0x218] sm:$0xff]
    %v123 = vld [vmem:[#allocation3 + $0x220] sm:$0xff]
    %v124 = vld [vmem:[#allocation3 + $0x228] sm:$0xff]
    %v125 = vld [vmem:[#allocation3 + $0x230] sm:$0xff]
    %v126 = vld [vmem:[#allocation3 + $0x238] sm:$0xff]
    %v127 = vld [vmem:[#allocation3 + $0x240] sm:$0xff]
    %v128 = vld [vmem:[#allocation3 + $0x248] sm:$0xff]
    %v129 = vld [vmem:[#allocation3 + $0x250] sm:$0xff]
    %v130 = vld [vmem:[#allocation3 + $0x258] sm:$0xff]
    %v131 = vld [vmem:[#allocation3 + $0x260] sm:$0xff]
    %v132 = vld [vmem:[#allocation3 + $0x268] sm:$0xff]
    %v133 = vld [vmem:[#allocation3 + $0x270] sm:$0xff]
    %v134 = vld [vmem:[#allocation3 + $0x278] sm:$0xff]
    %v135 = vld [vmem:[#allocation3 + $0x280] sm:$0xff]
    %v136 = vld [vmem:[#allocation3 + $0x288] sm:$0xff]
    %v137 = vld [vmem:[#allocation3 + $0x290] sm:$0xff]
    %v138 = vld [vmem:[#allocation3 + $0x298] sm:$0xff]
    %v139 = vld [vmem:[#allocation3 + $0x2a0] sm:$0xff]
    %v140 = vld [vmem:[#allocation3 + $0x2a8] sm:$0xff]
    %v141 = vld [vmem:[#allocation3 + $0x2b0] sm:$0xff]
    %v142 = vld [vmem:[#allocation3 + $0x2b8] sm:$0xff]
    %v143 = vld [vmem:[#allocation3 + $0x2c0] sm:$0xff]
    %v144 = vld [vmem:[#allocation3 + $0x2c8] sm:$0xff]
    %v145 = vld [vmem:[#allocation3 + $0x2d0] sm:$0xff]
    %v146 = vld [vmem:[#allocation3 + $0x2d8] sm:$0xff]
    %v147 = vld [vmem:[#allocation3 + $0x2e0] sm:$0xff]
    %v148 = vld [vmem:[#allocation3 + $0x2e8] sm:$0xff]
    %v149 = vld [vmem:[#allocation3 + $0x2f0] sm:$0xff]
    %v150 = vld [vmem:[#allocation3 + $0x2f8] sm:$0xff]
    %v151 = vld [vmem:[#allocation3 + $0x300] sm:$0xff]
    %v152 = vld [vmem:[#allocation3 + $0x308] sm:$0xff]
    %v153 = vld [vmem:[#allocation3 + $0x310] sm:$0xff]
    %v154 = vld [vmem:[#allocation3 + $0x318] sm:$0xff]
    %v155 = vld [vmem:[#allocation3 + $0x320] sm:$0xff]
    %v156 = vld [vmem:[#allocation3 + $0x328] sm:$0xff]
    %v157 = vld [vmem:[#allocation3 + $0x330] sm:$0xff]
    %v158 = vld [vmem:[#allocation3 + $0x338] sm:$0xff]
    %v159 = vld [vmem:[#allocation3 + $0x340] sm:$0xff]
    %v160 = vld [vmem:[#allocation3 + $0x348] sm:$0xff]
    %v161 = vld [vmem:[#allocation3 + $0x350] sm:$0xff]
    %v162 = vld [vmem:[#allocation3 + $0x358] sm:$0xff]
    %v163 = vld [vmem:[#allocation3 + $0x360] sm:$0xff]
    %v164 = vld [vmem:[#allocation3 + $0x368] sm:$0xff]
    %v165 = vld [vmem:[#allocation3 + $0x370] sm:$0xff]
    %v166 = vld [vmem:[#allocation3 + $0x378] sm:$0xff]
    %v167 = vld [vmem:[#allocation3 + $0x380] sm:$0xff]
    %v168 = vld [vmem:[#allocation3 + $0x388] sm:$0xff]
    %v169 = vld [vmem:[#allocation3 + $0x390] sm:$0xff]
    %v170 = vld [vmem:[#allocation3 + $0x398] sm:$0xff]
    %v171 = vld [vmem:[#allocation3 + $0x3a0] sm:$0xff]
    %v172 = vld [vmem:[#allocation3 + $0x3a8] sm:$0xff]
    %v173 = vld [vmem:[#allocation3 + $0x3b0] sm:$0xff]
    %v174 = vld [vmem:[#allocation3 + $0x3b8] sm:$0xff]
    %v175 = vld [vmem:[#allocation3 + $0x3c0] sm:$0xff]
    %v176 = vld [vmem:[#allocation3 + $0x3c8] sm:$0xff]
    %v177 = vld [vmem:[#allocation3 + $0x3d0] sm:$0xff]
    %v178 = vld [vmem:[#allocation3 + $0x3d8] sm:$0xff]
    %v179 = vld [vmem:[#allocation3 + $0x3e0] sm:$0xff]
    %v180 = vld [vmem:[#allocation3 + $0x3e8] sm:$0xff]
    %v181 = vld [vmem:[#allocation3 + $0x3f0] sm:$0xff]
    %v182 = vld [vmem:[#allocation3 + $0x3f8] sm:$0xff]
    %183 = vmatpush.msra.mxu0 %v115
    %184 = vmatpush.msra.mxu0 %v111
    %185 = vmatpush.msra.mxu0 %v107
    %186 = vmatpush.msra.mxu0 %v103
    %187 = vmatpush.msra.mxu0 %v99
    %188 = vmatpush.msra.mxu0 %v95
    %189 = vmatpush.msra.mxu0 %v91
    %190 = vmatpush.msra.mxu0 %v87
    %191 = vmatpush.msra.mxu0 %v83
    %192 = vmatpush.msra.mxu0 %v79
    %193 = vmatpush.msra.mxu0 %v75
    %194 = vmatpush.msra.mxu0 %v71
    %195 = vmatpush.msra.mxu0 %v67
    %196 = vmatpush.msra.mxu0 %v63
    %197 = vmatpush.msra.mxu0 %v59
    %198 = vmatpush.msra.mxu0 %v55
    %199 = vmatmul.f32.gmra.mxu0 %v51
    %v200 = vpop.f32.mrf.mxu0
    %v201 = vadd.f32 0.0, %v200
    %202 = vmatmul.f32.gmra.mxu0 %v53
    %v203 = vpop.f32.mrf.mxu0
    %v204 = vadd.f32 0.0, %v203
    %205 = vdwg.mxu0
    %206 = vmatpush.msra.mxu0 %v179
    %207 = vmatpush.msra.mxu0 %v175
    %208 = vmatpush.msra.mxu0 %v171
    %209 = vmatpush.msra.mxu0 %v167
    %210 = vmatpush.msra.mxu0 %v163
    %211 = vmatpush.msra.mxu0 %v159
    %212 = vmatpush.msra.mxu0 %v155
    %213 = vmatpush.msra.mxu0 %v151
    %214 = vmatpush.msra.mxu0 %v147
    %215 = vmatpush.msra.mxu0 %v143
    %216 = vmatpush.msra.mxu0 %v139
    %217 = vmatpush.msra.mxu0 %v135
    %218 = vmatpush.msra.mxu0 %v131
    %219 = vmatpush.msra.mxu0 %v127
    %220 = vmatpush.msra.mxu0 %v123
    %221 = vmatpush.msra.mxu0 %v119
    %222 = vmatmul.f32.gmra.mxu0 %v52
    %v223 = vpop.f32.mrf.mxu0
    %v224 = vadd.f32 %v201, %v223
    %225 = vmatmul.f32.gmra.mxu0 %v54
    %v226 = vpop.f32.mrf.mxu0
    %v227 = vadd.f32 %v204, %v226
    %228 = vdwg.mxu0
    %229 = vmatpush.msra.mxu0 %v116
    %230 = vmatpush.msra.mxu0 %v112
    %231 = vmatpush.msra.mxu0 %v108
    %232 = vmatpush.msra.mxu0 %v104
    %233 = vmatpush.msra.mxu0 %v100
    %234 = vmatpush.msra.mxu0 %v96
    %235 = vmatpush.msra.mxu0 %v92
    %236 = vmatpush.msra.mxu0 %v88
    %237 = vmatpush.msra.mxu0 %v84
    %238 = vmatpush.msra.mxu0 %v80
    %239 = vmatpush.msra.mxu0 %v76
    %240 = vmatpush.msra.mxu0 %v72
    %241 = vmatpush.msra.mxu0 %v68
    %242 = vmatpush.msra.mxu0 %v64
    %243 = vmatpush.msra.mxu0 %v60
    %244 = vmatpush.msra.mxu0 %v56
    %245 = vmatmul.f32.gmra.mxu0 %v51
    %v246 = vpop.f32.mrf.mxu0
    %v247 = vadd.f32 0.0, %v246
    %248 = vmatmul.f32.gmra.mxu0 %v53
    %v249 = vpop.f32.mrf.mxu0
    %v250 = vadd.f32 0.0, %v249
    %251 = vdwg.mxu0
    %252 = vmatpush.msra.mxu0 %v180
    %253 = vmatpush.msra.mxu0 %v176
    %254 = vmatpush.msra.mxu0 %v172
    %255 = vmatpush.msra.mxu0 %v168
    %256 = vmatpush.msra.mxu0 %v164
    %257 = vmatpush.msra.mxu0 %v160
    %258 = vmatpush.msra.mxu0 %v156
    %259 = vmatpush.msra.mxu0 %v152
    %260 = vmatpush.msra.mxu0 %v148
    %261 = vmatpush.msra.mxu0 %v144
    %262 = vmatpush.msra.mxu0 %v140
    %263 = vmatpush.msra.mxu0 %v136
    %264 = vmatpush.msra.mxu0 %v132
    %265 = vmatpush.msra.mxu0 %v128
    %266 = vmatpush.msra.mxu0 %v124
    %267 = vmatpush.msra.mxu0 %v120
    %268 = vmatmul.f32.gmra.mxu0 %v52
    %v269 = vpop.f32.mrf.mxu0
    %v270 = vadd.f32 %v247, %v269
    %271 = vmatmul.f32.gmra.mxu0 %v54
    %v272 = vpop.f32.mrf.mxu0
    %v273 = vadd.f32 %v250, %v272
    %274 = vdwg.mxu0
    %275 = vmatpush.msra.mxu0 %v117
    %276 = vmatpush.msra.mxu0 %v113
    %277 = vmatpush.msra.mxu0 %v109
    %278 = vmatpush.msra.mxu0 %v105
    %279 = vmatpush.msra.mxu0 %v101
    %280 = vmatpush.msra.mxu0 %v97
    %281 = vmatpush.msra.mxu0 %v93
    %282 = vmatpush.msra.mxu0 %v89
    %283 = vmatpush.msra.mxu0 %v85
    %284 = vmatpush.msra.mxu0 %v81
    %285 = vmatpush.msra.mxu0 %v77
    %286 = vmatpush.msra.mxu0 %v73
    %287 = vmatpush.msra.mxu0 %v69
    %288 = vmatpush.msra.mxu0 %v65
    %289 = vmatpush.msra.mxu0 %v61
    %290 = vmatpush.msra.mxu0 %v57
    %291 = vmatmul.f32.gmra.mxu0 %v51
    %v292 = vpop.f32.mrf.mxu0
    %v293 = vadd.f32 0.0, %v292
    %294 = vmatmul.f32.gmra.mxu0 %v53
    %v295 = vpop.f32.mrf.mxu0
    %v296 = vadd.f32 0.0, %v295
    %297 = vdwg.mxu0
    %298 = vmatpush.msra.mxu0 %v181
    %299 = vmatpush.msra.mxu0 %v177
    %300 = vmatpush.msra.mxu0 %v173
    %301 = vmatpush.msra.mxu0 %v169
    %302 = vmatpush.msra.mxu0 %v165
    %303 = vmatpush.msra.mxu0 %v161
    %304 = vmatpush.msra.mxu0 %v157
    %305 = vmatpush.msra.mxu0 %v153
    %306 = vmatpush.msra.mxu0 %v149
    %307 = vmatpush.msra.mxu0 %v145
    %308 = vmatpush.msra.mxu0 %v141
    %309 = vmatpush.msra.mxu0 %v137
    %310 = vmatpush.msra.mxu0 %v133
    %311 = vmatpush.msra.mxu0 %v129
    %312 = vmatpush.msra.mxu0 %v125
    %313 = vmatpush.msra.mxu0 %v121
    %314 = vmatmul.f32.gmra.mxu0 %v52
    %v315 = vpop.f32.mrf.mxu0
    %v316 = vadd.f32 %v293, %v315
    %317 = vmatmul.f32.gmra.mxu0 %v54
    %v318 = vpop.f32.mrf.mxu0
    %v319 = vadd.f32 %v296, %v318
    %320 = vdwg.mxu0
    %321 = vmatpush.msra.mxu0 %v118
    %322 = vmatpush.msra.mxu0 %v114
    %323 = vmatpush.msra.mxu0 %v110
    %324 = vmatpush.msra.mxu0 %v106
    %325 = vmatpush.msra.mxu0 %v102
    %326 = vmatpush.msra.mxu0 %v98
    %327 = vmatpush.msra.mxu0 %v94
    %328 = vmatpush.msra.mxu0 %v90
    %329 = vmatpush.msra.mxu0 %v86
    %330 = vmatpush.msra.mxu0 %v82
    %331 = vmatpush.msra.mxu0 %v78
    %332 = vmatpush.msra.mxu0 %v74
    %333 = vmatpush.msra.mxu0 %v70
    %334 = vmatpush.msra.mxu0 %v66
    %335 = vmatpush.msra.mxu0 %v62
    %336 = vmatpush.msra.mxu0 %v58
    %337 = vmatmul.f32.gmra.mxu0 %v51
    %v338 = vpop.f32.mrf.mxu0
    %v339 = vadd.f32 0.0, %v338
    %340 = vmatmul.f32.gmra.mxu0 %v53
    %v341 = vpop.f32.mrf.mxu0
    %v342 = vadd.f32 0.0, %v341
    %343 = vdwg.mxu0
    %344 = vmatpush.msra.mxu0 %v182
    %345 = vmatpush.msra.mxu0 %v178
    %346 = vmatpush.msra.mxu0 %v174
    %347 = vmatpush.msra.mxu0 %v170
    %348 = vmatpush.msra.mxu0 %v166
    %349 = vmatpush.msra.mxu0 %v162
    %350 = vmatpush.msra.mxu0 %v158
    %351 = vmatpush.msra.mxu0 %v154
    %352 = vmatpush.msra.mxu0 %v150
    %353 = vmatpush.msra.mxu0 %v146
    %354 = vmatpush.msra.mxu0 %v142
    %355 = vmatpush.msra.mxu0 %v138
    %356 = vmatpush.msra.mxu0 %v134
    %357 = vmatpush.msra.mxu0 %v130
    %358 = vmatpush.msra.mxu0 %v126
    %359 = vmatpush.msra.mxu0 %v122
    %360 = vmatmul.f32.gmra.mxu0 %v52
    %v361 = vpop.f32.mrf.mxu0
    %v362 = vadd.f32 %v339, %v361
    %363 = vmatmul.f32.gmra.mxu0 %v54
    %v364 = vpop.f32.mrf.mxu0
    %v365 = vadd.f32 %v342, %v364
    %366 = vdwg.mxu0
    %v367 = vadd.f32 %v43, %v224
    %v368 = vadd.f32 %v44, %v270
    %v369 = vadd.f32 %v45, %v316
    %v370 = vadd.f32 %v46, %v362
    %v371 = vadd.f32 %v47, %v227
    %v372 = vadd.f32 %v48, %v273
    %v373 = vadd.f32 %v49, %v319
    %v374 = vadd.f32 %v50, %v365
    %375 = vst [vmem:[#allocation2] sm:$0xff] %v367
    %376 = vst [vmem:[#allocation2 + $0x8] sm:$0xff] %v368
    %377 = vst [vmem:[#allocation2 + $0x10] sm:$0xff] %v369
    %378 = vst [vmem:[#allocation2 + $0x18] sm:$0xff] %v370
    %379 = vst [vmem:[#allocation2 + $0x20] sm:$0xff] %v371
    %380 = vst [vmem:[#allocation2 + $0x28] sm:$0xff] %v372
    %381 = vst [vmem:[#allocation2 + $0x30] sm:$0xff] %v373
    %382 = vst [vmem:[#allocation2 + $0x38] sm:$0xff] %v374
    // Predicated region
    $region22: #{forward.1} parent=1 // pred_check
      %p383 = pneg %p31
    $region23: #{forward.1} parent=1 // pred_check_branch
      %385 = sbr.rel (%p383) target = $region25
    $region24: #{forward.1} parent=1 // pred_region
      %v386 = vld [vmem:[#allocation2] sm:$0xff]
      %v387 = vld [vmem:[#allocation2 + $0x8] sm:$0xff]
      %v388 = vld [vmem:[#allocation2 + $0x10] sm:$0xff]
      %v389 = vld [vmem:[#allocation2 + $0x18] sm:$0xff]
      %v390 = vld [vmem:[#allocation2 + $0x20] sm:$0xff]
      %v391 = vld [vmem:[#allocation2 + $0x28] sm:$0xff]
      %v392 = vld [vmem:[#allocation2 + $0x30] sm:$0xff]
      %v393 = vld [vmem:[#allocation2 + $0x38] sm:$0xff]
      %v394 = vld [vmem:[%s2] sm:$0xff]
      %v395 = vld [vmem:[%s2 + $0x8] sm:$0xff]
      %v396 = vld [vmem:[%s2 + $0x10] sm:$0xff]
      %v397 = vld [vmem:[%s2 + $0x18] sm:$0xff]
      %v398 = vld [vmem:[%s2 + $0x20] sm:$0xff]
      %v399 = vld [vmem:[%s2 + $0x28] sm:$0xff]
      %v400 = vld [vmem:[%s2 + $0x30] sm:$0xff]
      %v401 = vld [vmem:[%s2 + $0x38] sm:$0xff]
      %v402 = vmul.f32 %v394, 10.0
      %v403 = vmul.f32 %v395, 10.0
      %v404 = vmul.f32 %v396, 10.0
      %v405 = vmul.f32 %v397, 10.0
      %v406 = vmul.f32 %v398, 10.0
      %v407 = vmul.f32 %v399, 10.0
      %v408 = vmul.f32 %v400, 10.0
      %v409 = vmul.f32 %v401, 10.0
      %v410 = vadd.f32 %v386, %v402
      %v411 = vadd.f32 %v387, %v403
      %v412 = vadd.f32 %v388, %v404
      %v413 = vadd.f32 %v389, %v405
      %v414 = vadd.f32 %v390, %v406
      %v415 = vadd.f32 %v391, %v407
      %v416 = vadd.f32 %v392, %v408
      %v417 = vadd.f32 %v393, %v409
      %418 = vst [vmem:[#allocation6] sm:$0xff] %v410
      %419 = vst [vmem:[#allocation6 + $0x8] sm:$0xff] %v411
      %420 = vst [vmem:[#allocation6 + $0x10] sm:$0xff] %v412
      %421 = vst [vmem:[#allocation6 + $0x18] sm:$0xff] %v413
      %422 = vst [vmem:[#allocation6 + $0x20] sm:$0xff] %v414
      %423 = vst [vmem:[#allocation6 + $0x28] sm:$0xff] %v415
      %424 = vst [vmem:[#allocation6 + $0x30] sm:$0xff] %v416
      %425 = vst [vmem:[#allocation6 + $0x38] sm:$0xff] %v417
    $region25: #{forward.1} parent=1 // pred_fallthru
      _
    // Predicated region
    $region26: #{forward.1} parent=1 // pred_check
      _
    $region27: #{forward.1} parent=1 // pred_check_branch
      %427 = sbr.rel (0) target = $region29
    $region28: #{forward.1} parent=1 // pred_region
      %429 = vsyncadd [#allocation5], 0
      %s430 = sshll.u32 [#allocation6], 4
      %s431 = int_to_ptr.vmem [resolvable:$true] %s430
      %s432 = sshll.u32 %s3, 4
      %s433 = int_to_ptr.hbm [resolvable:$true] %s432
      %438 = dma.vmem_to_hbm [thread:$0]  %s431, 1024, %s433, [#allocation5], 512, 512, 32
    $region29: #{forward.1} parent=1 // pred_fallthru
      _
    // Predicated region
    $region30: #{forward.1} parent=1 // pred_check
      _
    $region31: #{forward.1} parent=1 // pred_check_branch
      %440 = sbr.rel (0) target = $region33
    $region32: #{forward.1} parent=1 // pred_region
      %442 = dma.done [#allocation5], 1024
    $region33: #{forward.1} parent=1 // pred_fallthru
      _
    %443 = vsyncpa [#allocation4], 1
    %444 = vsyncpa [#allocation5], 1

</llo_original>
